<compile_context>
chip_gen: v7x
topology: tpu7x:2x2x1
jax: 0.10.0
libtpu: 0.0.40
codegen_flags: <defaults>
</compile_context>

<pallas_src>
import functools

import jax
import jax.numpy as jnp
from jax.experimental import pallas as pl
from jax.experimental.pallas import tpu as pltpu

F_IN = 3      # option features (S, K, T)
H = 100       # hidden width
H_PAD = 128   # hidden width padded up to one full lane/MXU tile

# Row layout of the consolidated resident (8, H_PAD) vector slab:
#   rows 0..2 : w1 (3 x 128)   row 3 : b1   row 4 : b2   row 5 : w3 row   rows 6..7 : zero
ROW_B1, ROW_B2, ROW_W3 = 3, 4, 5


def _round_up(n, m):
    return ((n + m - 1) // m) * m


def mlp_kernel(x_ref, vec_ref, w2_ref, o_ref):
    x = x_ref[...]                                            # (tb, 3) f32
    # ---- fc1 + ReLU on the VPU: K=3 contraction as three lane-broadcast FMAs. ----
    h = (x[:, 0:1] * vec_ref[0:1, :]
         + x[:, 1:2] * vec_ref[1:2, :]
         + x[:, 2:3] * vec_ref[2:3, :]
         + vec_ref[ROW_B1:ROW_B1 + 1, :])                     # (tb, 128)
    h = jnp.maximum(h, 0.0)
    # ---- fc2 + ReLU: single MXU matmul per tile, bf16 inputs, f32 accumulate. ----
    h = jnp.dot(h.astype(jnp.bfloat16), w2_ref[...],
                preferred_element_type=jnp.float32)           # (tb, 128) f32
    h = jnp.maximum(h + vec_ref[ROW_B2:ROW_B2 + 1, :], 0.0)
    # ---- fc3 (N=1): VPU multiply + XLU cross-lane reduce (no MXU matvec / transpose). ----
    o_ref[...] = jnp.sum(h * vec_ref[ROW_W3:ROW_W3 + 1, :], axis=-1,
                         keepdims=True).astype(o_ref.dtype)   # (tb, 1)


def prepare_params(params):
    """One-time pad/cast of torch-layout params -> kernel-resident arrays.

    Call once at init (NOT per forward): padded rows/cols are exact zeros, so
    ReLU(0)=0 keeps the padded lanes dead and the numerics identical.
    """
    w1, b1, w2, b2, w3, b3 = params
    vecs = jnp.zeros((8, H_PAD), jnp.float32)
    vecs = vecs.at[0:F_IN, :H].set(jnp.asarray(w1, jnp.float32))
    vecs = vecs.at[ROW_B1, :H].set(jnp.asarray(b1, jnp.float32).reshape(-1))
    vecs = vecs.at[ROW_B2, :H].set(jnp.asarray(b2, jnp.float32).reshape(-1))
    vecs = vecs.at[ROW_W3, :H].set(jnp.asarray(w3, jnp.float32).reshape(-1))
    w2p = (jnp.zeros((H_PAD, H_PAD), jnp.float32)
           .at[:H, :H].set(jnp.asarray(w2, jnp.float32))
           .astype(jnp.bfloat16))                             # bf16 MXU operand
    b3p = jnp.asarray(b3, jnp.float32).reshape(())
    return vecs, w2p, b3p


@functools.partial(jax.jit, static_argnames=("tile_b",))
def option_pricing_forward(x, padded_params, tile_b=2048):
    """x: (B, 3) -> (B, 1). padded_params = prepare_params(raw_params)."""
    vecs, w2p, b3p = padded_params
    B = x.shape[0]
    assert x.shape[1] == F_IN

    # Clamp the tile so the grid has >= 2 steps whenever B allows it (lets v7x's two
    # TensorCores split the "parallel" batch axis); harmless on single-TC v5e/v6e.
    tb = max(8, min(tile_b, _round_up(pl.cdiv(B, 2), 8)))
    b_pad = _round_up(B, tb)
    num_tiles = b_pad // tb

    xp = x.astype(jnp.float32)
    if b_pad != B:
        xp = jnp.pad(xp, ((0, b_pad - B), (0, 0)))

    out = pl.pallas_call(
        mlp_kernel,
        out_shape=jax.ShapeDtypeStruct((b_pad, 1), jnp.float32),
        grid=(num_tiles,),
        in_specs=[
            pl.BlockSpec((tb, F_IN), lambda i: (i, 0)),        # x: streamed batch tiles
            pl.BlockSpec((8, H_PAD), lambda i: (0, 0)),        # resident param slab
            pl.BlockSpec((H_PAD, H_PAD), lambda i: (0, 0)),    # resident w2 (bf16)
        ],
        out_specs=pl.BlockSpec((tb, 1), lambda i: (i, 0)),
        compiler_params=pltpu.CompilerParams(
            dimension_semantics=("parallel",),
            vmem_limit_bytes=32 << 20),
    )(xp, vecs, w2p)

    # fc3 bias is a single scalar: add it in the wrapper (one fewer kernel input).
    return out[:B] + b3p


def init_params(key):
    # Deterministic init mimicking nn.Linear default (uniform +/- 1/sqrt(fan_in)).
    def linear(k, fan_in, fan_out):
        kw, kb = jax.random.split(k)
        bound = 1.0 / jnp.sqrt(fan_in)
        w = jax.random.uniform(kw, (fan_in, fan_out), jnp.float32, -bound, bound)
        b = jax.random.uniform(kb, (fan_out,), jnp.float32, -bound, bound)
        return w, b

    k1, k2, k3 = jax.random.split(key, 3)
    w1, b1 = linear(k1, 3, 100)
    w2, b2 = linear(k2, 100, 100)
    w3, b3 = linear(k3, 100, 1)
    return (w1, b1, w2, b2, w3, b3)


def reference_forward(x, params):
    w1, b1, w2, b2, w3, b3 = params
    h = jnp.maximum(x @ w1 + b1, 0.0)
    h = jnp.maximum(h @ w2 + b2, 0.0)
    return h @ w3 + b3


if __name__ == "__main__":
    key = jax.random.PRNGKey(0)
    kx, kp, kx2 = jax.random.split(key, 3)
    raw_params = init_params(kp)
    padded_params = prepare_params(raw_params)   # once at init, not per call

    # fc2 runs in bf16 (f32 accumulate) -> loosened tolerance vs the f32 reference.
    ATOL = RTOL = 5e-2

    # Small smoke test (single tile, batch=8).
    batch = 8
    x = jax.random.normal(kx, (batch, F_IN), jnp.float32)
    out = jax.block_until_ready(option_pricing_forward(x, padded_params))
    ref = reference_forward(x, raw_params)
    assert out.shape == (batch, 1)
    assert jnp.allclose(out, ref, atol=ATOL, rtol=RTOL)

    # Multi-tile test exercising the batch grid, resident weights, and padding path.
    batch2 = 1000
    x2 = jax.random.normal(kx2, (batch2, F_IN), jnp.float32)
    out2 = jax.block_until_ready(option_pricing_forward(x2, padded_params, tile_b=256))
    ref2 = reference_forward(x2, raw_params)
    assert out2.shape == (batch2, 1)
    assert jnp.allclose(out2, ref2, atol=ATOL, rtol=RTOL)

    print("KERNEL_OK")
</pallas_src>

<mosaic_0001>
module attributes {stable_mosaic.version = 11 : i64} {
  func.func @mlp_kernel(%arg0: i32, %arg1: memref<8x3xf32, #tpu.memory_space<vmem>>, %arg2: memref<8x128xf32, #tpu.memory_space<vmem>>, %arg3: memref<128x128xbf16, #tpu.memory_space<vmem>>, %arg4: memref<8x1xf32, #tpu.memory_space<vmem>>) attributes {dimension_semantics = [#tpu.dimension_semantics<parallel>], iteration_bounds = array<i64: 1>, scalar_prefetch = 0 : i64, scratch_operands = 0 : i64, tpu.core_type = #tpu.core_type<tc>, window_params = [{transform_indices = @transform_0, window_bounds = array<i64: 8, 3>}, {pipeline_mode = #tpu.pipeline_mode<synchronous>, transform_indices = @transform_1, window_bounds = array<i64: 8, 128>}, {pipeline_mode = #tpu.pipeline_mode<synchronous>, transform_indices = @transform_2, window_bounds = array<i64: 128, 128>}, {transform_indices = @transform_3, window_bounds = array<i64: 8, 1>}]} {
    %c0 = arith.constant 0 : index
    %c0_0 = arith.constant 0 : index
    %0 = vector.load %arg1[%c0, %c0_0] : memref<8x3xf32, #tpu.memory_space<vmem>>, vector<8x3xf32>
    %1 = vector.extract_strided_slice %0 {offsets = [0, 0], sizes = [8, 1], strides = [1, 1]} : vector<8x3xf32> to vector<8x1xf32>
    %c0_1 = arith.constant 0 : index
    %c0_2 = arith.constant 0 : index
    %2 = vector.load %arg2[%c0_1, %c0_2] : memref<8x128xf32, #tpu.memory_space<vmem>>, vector<1x128xf32>
    %3 = vector.broadcast %1 : vector<8x1xf32> to vector<8x128xf32>
    %4 = vector.broadcast %2 : vector<1x128xf32> to vector<8x128xf32>
    %5 = arith.mulf %3, %4 : vector<8x128xf32>
    %6 = vector.extract_strided_slice %0 {offsets = [0, 1], sizes = [8, 1], strides = [1, 1]} : vector<8x3xf32> to vector<8x1xf32>
    %c1 = arith.constant 1 : index
    %c0_3 = arith.constant 0 : index
    %7 = vector.load %arg2[%c1, %c0_3] : memref<8x128xf32, #tpu.memory_space<vmem>>, vector<1x128xf32>
    %8 = vector.broadcast %6 : vector<8x1xf32> to vector<8x128xf32>
    %9 = vector.broadcast %7 : vector<1x128xf32> to vector<8x128xf32>
    %10 = arith.mulf %8, %9 : vector<8x128xf32>
    %11 = arith.addf %5, %10 : vector<8x128xf32>
    %12 = vector.extract_strided_slice %0 {offsets = [0, 2], sizes = [8, 1], strides = [1, 1]} : vector<8x3xf32> to vector<8x1xf32>
    %c2 = arith.constant 2 : index
    %c0_4 = arith.constant 0 : index
    %13 = vector.load %arg2[%c2, %c0_4] : memref<8x128xf32, #tpu.memory_space<vmem>>, vector<1x128xf32>
    %14 = vector.broadcast %12 : vector<8x1xf32> to vector<8x128xf32>
    %15 = vector.broadcast %13 : vector<1x128xf32> to vector<8x128xf32>
    %16 = arith.mulf %14, %15 : vector<8x128xf32>
    %17 = arith.addf %11, %16 : vector<8x128xf32>
    %c3 = arith.constant 3 : index
    %c0_5 = arith.constant 0 : index
    %18 = vector.load %arg2[%c3, %c0_5] : memref<8x128xf32, #tpu.memory_space<vmem>>, vector<1x128xf32>
    %19 = vector.broadcast %18 : vector<1x128xf32> to vector<8x128xf32>
    %20 = arith.addf %17, %19 : vector<8x128xf32>
    %cst = arith.constant 0.000000e+00 : f32
    %21 = vector.broadcast %cst : f32 to vector<8x128xf32>
    %22 = arith.maximumf %20, %21 : vector<8x128xf32>
    %23 = arith.truncf %22 : vector<8x128xf32> to vector<8x128xbf16>
    %c0_6 = arith.constant 0 : index
    %c0_7 = arith.constant 0 : index
    %24 = vector.load %arg3[%c0_6, %c0_7] : memref<128x128xbf16, #tpu.memory_space<vmem>>, vector<128x128xbf16>
    %cst_8 = arith.constant dense<0.000000e+00> : vector<8x128xf32>
    %25 = tpu.matmul %23, %24, %cst_8 {dimension_numbers = #tpu.dot_dimension_numbers<[1], [0], [0], [1], [0, 0, 1, 1], [], []>} : vector<8x128xbf16>, vector<128x128xbf16>, vector<8x128xf32> -> vector<8x128xf32>
    %c4 = arith.constant 4 : index
    %c0_9 = arith.constant 0 : index
    %26 = vector.load %arg2[%c4, %c0_9] : memref<8x128xf32, #tpu.memory_space<vmem>>, vector<1x128xf32>
    %27 = vector.broadcast %26 : vector<1x128xf32> to vector<8x128xf32>
    %28 = arith.addf %25, %27 : vector<8x128xf32>
    %cst_10 = arith.constant 0.000000e+00 : f32
    %29 = vector.broadcast %cst_10 : f32 to vector<8x128xf32>
    %30 = arith.maximumf %28, %29 : vector<8x128xf32>
    %c5 = arith.constant 5 : index
    %c0_11 = arith.constant 0 : index
    %31 = vector.load %arg2[%c5, %c0_11] : memref<8x128xf32, #tpu.memory_space<vmem>>, vector<1x128xf32>
    %32 = vector.broadcast %31 : vector<1x128xf32> to vector<8x128xf32>
    %33 = arith.mulf %30, %32 : vector<8x128xf32>
    %cst_12 = arith.constant dense<0.000000e+00> : vector<8xf32>
    %34 = vector.multi_reduction <add>, %33, %cst_12 [1] : vector<8x128xf32> to vector<8xf32>
    %35 = vector.shape_cast %34 : vector<8xf32> to vector<8x1xf32>
    %c0_13 = arith.constant 0 : index
    %c0_14 = arith.constant 0 : index
    %36 = vector.load %arg4[%c0_13, %c0_14] : memref<8x1xf32, #tpu.memory_space<vmem>>, vector<8x1xf32>
    tpu.vector_store %arg4[%c0_13, %c0_14], %35 {strides = array<i32>} : memref<8x1xf32, #tpu.memory_space<vmem>>, vector<8x1xf32>,
    return
  }
  func.func @transform_0(%arg0: i32) -> (i32, i32) {
    %c0_i32 = arith.constant 0 : i32
    %c0_i32_0 = arith.constant 0 : i32
    return %arg0, %c0_i32 : i32, i32
  }
  func.func @transform_1(%arg0: i32) -> (i32, i32) {
    %c0_i32 = arith.constant 0 : i32
    %c0_i32_0 = arith.constant 0 : i32
    %c0_i32_1 = arith.constant 0 : i32
    return %c0_i32, %c0_i32_0 : i32, i32
  }
  func.func @transform_2(%arg0: i32) -> (i32, i32) {
    %c0_i32 = arith.constant 0 : i32
    %c0_i32_0 = arith.constant 0 : i32
    %c0_i32_1 = arith.constant 0 : i32
    return %c0_i32, %c0_i32_0 : i32, i32
  }
  func.func @transform_3(%arg0: i32) -> (i32, i32) {
    %c0_i32 = arith.constant 0 : i32
    %c0_i32_0 = arith.constant 0 : i32
    return %arg0, %c0_i32 : i32, i32
  }
}

</mosaic_0001>

<llo_original>
// kernel: option_pricing_forward.1
$region0: #{option_pricing_forward.1}
  #allocation0 [shape = 'u32[]', space=smem, size = 0x4, offset = 0x4, fixed_abs, tag = 'smem constant byte address 0x4 - core index']
  #allocation1 [shape = 'u32[144,128]{1,0:T(1,128)}', space=vmem, size = 0x12000, scoped, tag = 'internal scratch']
  %s0 = inlined_call_operand.vmem [shape: f32[8,3], index: 0, kind: input, shape index: {}]
  %s1 = inlined_call_operand.vmem [shape: f32[8,128], index: 1, kind: input, shape index: {}]
  %s2 = inlined_call_operand.hbm [shape: bf16[128,128], index: 2, kind: input, shape index: {}]
  %s3 = inlined_call_operand.vmem [shape: f32[8,1], index: 3, kind: output, shape index: {}]
  %s4 = sld [smem:[#allocation0]]
  $region26: #{option_pricing_forward.1} parent=0
    _
  %s6 = ssub.s32 1, %s4
  %s7 = scalar_select 0, %s6, %s4
  $region1: #{option_pricing_forward.1} parent=0
    #allocation2 [shape = 'u8[32768]{0}', space=vmem, size = 0x8000, scoped, tag = 'input window, operand 2, single buffered']
    #allocation3 [shape = 's32[1]{0}', space=sflag, size = 0x4, scoped, tag = 'scoped memory for option_pricing_forward.1']
    %8 = vsyncpa [#allocation3], 0
    // Predicated region
    $region2: #{option_pricing_forward.1} parent=1 // pred_check
      _
    $region3: #{option_pricing_forward.1} parent=1 // pred_check_branch
      %10 = sbr.rel (0) target = $region5
    $region4: #{option_pricing_forward.1} parent=1 // pred_region
      _
    $region5: #{option_pricing_forward.1} parent=1 // pred_fallthru
      _
    // Predicated region
    $region6: #{option_pricing_forward.1} parent=1 // pred_check
      _
    $region7: #{option_pricing_forward.1} parent=1 // pred_check_branch
      %12 = sbr.rel (0) target = $region9
    $region8: #{option_pricing_forward.1} parent=1 // pred_region
      _
    $region9: #{option_pricing_forward.1} parent=1 // pred_fallthru
      _
    // Predicated region
    $region10: #{option_pricing_forward.1} parent=1 // pred_check
      _
    $region11: #{option_pricing_forward.1} parent=1 // pred_check_branch
      %14 = sbr.rel (0) target = $region13
    $region12: #{option_pricing_forward.1} parent=1 // pred_region
      %s16 = ssub.s32 1024, 1024
      %17 = vsyncadd [#allocation3], %s16
      %s18 = sshll.u32 [#allocation2], 4
      %s19 = int_to_ptr.vmem [resolvable:$true] %s18
      %24 = dma.hbm_to_vmem [thread:$0]  %s2, 1024, %s19, [#allocation3], 64, 64, 4
    $region13: #{option_pricing_forward.1} parent=1 // pred_fallthru
      _
    // Predicated region
    $region14: #{option_pricing_forward.1} parent=1 // pred_check
      _
    $region15: #{option_pricing_forward.1} parent=1 // pred_check_branch
      %26 = sbr.rel (0) target = $region17
    $region16: #{option_pricing_forward.1} parent=1 // pred_region
      %27 = dma.done [#allocation3], 1024
    $region17: #{option_pricing_forward.1} parent=1 // pred_fallthru
      _
    %v29 = vld [vmem:[%s0] sm:$0xff]
    %v30 = vld [vmem:[%s1] sm:$0x1]
    %32 = vset.pattern.permute.xlu0 0
    %33 = vperm.xlu0 %32, %v29
    %v34 = vpop.permute.xlu0 %33
    %v36 = vlaneseq
    %v37 = vshrl.u32 %v36, 7
    %v38 = vsub.s32 0, %v37
    %v39 = vrot.slane %v30, %v38
    %v40 = vmul.f32 %v34, %v39
    %v41 = vld [vmem:[%s1 + $0x1] sm:$0x1]
    %42 = vset.pattern.permute.xlu0 1
    %43 = vperm.xlu0 %42, %v29
    %v44 = vpop.permute.xlu0 %43
    %v46 = vlaneseq
    %v47 = vshrl.u32 %v46, 7
    %v48 = vsub.s32 0, %v47
    %v49 = vrot.slane %v41, %v48
    %v50 = vmul.f32 %v44, %v49
    %v51 = vadd.f32 %v40, %v50
    %v52 = vld [vmem:[%s1 + $0x2] sm:$0x1]
    %53 = vset.pattern.permute.xlu0 2
    %54 = vperm.xlu0 %53, %v29
    %v55 = vpop.permute.xlu0 %54
    %v57 = vlaneseq
    %v58 = vshrl.u32 %v57, 7
    %v59 = vsub.s32 0, %v58
    %v60 = vrot.slane %v52, %v59
    %v61 = vmul.f32 %v55, %v60
    %v62 = vadd.f32 %v51, %v61
    %v63 = vld [vmem:[%s1 + $0x3] sm:$0x1]
    %v64 = vlaneseq
    %v65 = vshrl.u32 %v64, 7
    %v66 = vsub.s32 0, %v65
    %v67 = vrot.slane %v63, %v66
    %v68 = vadd.f32 %v62, %v67
    %v69 = vmax.f32 %v68, 0.0
    %v70 = vpack.c.bf16 %v69, %v69
    %v71 = vld [vmem:[#allocation2] sm:$0xf]
    %v72 = vld [vmem:[#allocation2 + $0x4] sm:$0xf]
    %v73 = vld [vmem:[#allocation2 + $0x8] sm:$0xf]
    %v74 = vld [vmem:[#allocation2 + $0xc] sm:$0xf]
    %v75 = vld [vmem:[#allocation2 + $0x10] sm:$0xf]
    %v76 = vld [vmem:[#allocation2 + $0x14] sm:$0xf]
    %v77 = vld [vmem:[#allocation2 + $0x18] sm:$0xf]
    %v78 = vld [vmem:[#allocation2 + $0x1c] sm:$0xf]
    %v79 = vld [vmem:[#allocation2 + $0x20] sm:$0xf]
    %v80 = vld [vmem:[#allocation2 + $0x24] sm:$0xf]
    %v81 = vld [vmem:[#allocation2 + $0x28] sm:$0xf]
    %v82 = vld [vmem:[#allocation2 + $0x2c] sm:$0xf]
    %v83 = vld [vmem:[#allocation2 + $0x30] sm:$0xf]
    %v84 = vld [vmem:[#allocation2 + $0x34] sm:$0xf]
    %v85 = vld [vmem:[#allocation2 + $0x38] sm:$0xf]
    %v86 = vld [vmem:[#allocation2 + $0x3c] sm:$0xf]
    %v87 = vld [vmem:[%s1 + $0x4] sm:$0x1]
    %v88 = vlaneseq
    %v89 = vshrl.u32 %v88, 7
    %v90 = vsub.s32 0, %v89
    %v91 = vrot.slane %v87, %v90
    %v108 = vunpack.c.l.b16 %v71
    %v109 = vunpack.c.l.b16 %v72
    %v110 = vunpack.c.l.b16 %v73
    %v111 = vunpack.c.l.b16 %v74
    %v112 = vunpack.c.l.b16 %v75
    %v113 = vunpack.c.l.b16 %v76
    %v114 = vunpack.c.l.b16 %v77
    %v115 = vunpack.c.l.b16 %v78
    %v116 = vunpack.c.l.b16 %v79
    %v117 = vunpack.c.l.b16 %v80
    %v118 = vunpack.c.l.b16 %v81
    %v119 = vunpack.c.l.b16 %v82
    %v120 = vunpack.c.l.b16 %v83
    %v121 = vunpack.c.l.b16 %v84
    %v122 = vunpack.c.l.b16 %v85
    %v123 = vunpack.c.l.b16 %v86
    %v124 = vpack.c.b16 %v109, %v108
    %v125 = vpack.c.b16 %v111, %v110
    %v126 = vpack.c.b16 %v113, %v112
    %v127 = vpack.c.b16 %v115, %v114
    %v128 = vpack.c.b16 %v117, %v116
    %v129 = vpack.c.b16 %v119, %v118
    %v130 = vpack.c.b16 %v121, %v120
    %v131 = vpack.c.b16 %v123, %v122
    %140 = vmatprep.subr.bf16.mxu0 0
    %141 = vmatpush1.bf16.msra.mxu0 %v124
    %142 = vmatprep.subr.bf16.mxu0 0
    %143 = vmatpush1.bf16.msra.mxu0 %v125
    %144 = vmatprep.subr.bf16.mxu0 0
    %145 = vmatpush1.bf16.msra.mxu0 %v126
    %146 = vmatprep.subr.bf16.mxu0 0
    %147 = vmatpush1.bf16.msra.mxu0 %v127
    %148 = vmatprep.subr.bf16.mxu0 0
    %149 = vmatpush1.bf16.msra.mxu0 %v128
    %150 = vmatprep.subr.bf16.mxu0 0
    %151 = vmatpush1.bf16.msra.mxu0 %v129
    %152 = vmatprep.subr.bf16.mxu0 0
    %153 = vmatpush1.bf16.msra.mxu0 %v130
    %154 = vmatprep.subr.bf16.mxu0 0
    %155 = vmatpush1.bf16.msra.mxu0 %v131
    %156 = vmatprep.subr.bf16.mxu0 0
    %157 = vmatpush1.bf16.msra.mxu0 0
    %158 = vmatprep.subr.bf16.mxu0 0
    %159 = vmatpush1.bf16.msra.mxu0 0
    %160 = vmatprep.subr.bf16.mxu0 0
    %161 = vmatpush1.bf16.msra.mxu0 0
    %162 = vmatprep.subr.bf16.mxu0 0
    %163 = vmatpush1.bf16.msra.mxu0 0
    %164 = vmatprep.subr.bf16.mxu0 0
    %165 = vmatpush1.bf16.msra.mxu0 0
    %166 = vmatprep.subr.bf16.mxu0 0
    %167 = vmatpush1.bf16.msra.mxu0 0
    %168 = vmatprep.subr.bf16.mxu0 0
    %169 = vmatpush1.bf16.msra.mxu0 0
    %170 = vmatprep.subr.bf16.mxu0 0
    %171 = vmatpush1.bf16.msra.mxu0 0
    %172 = vmatprep.mubr.bf16.mxu0 0
    %173 = vmatmul.mubr.bf16.gmra.mrb[0].mxu0 %v70
    %v174 = vpop.f32.mrb[0].mxu0
    %v175 = vadd.f32 %v91, %v174
    %v176 = vpop.f32.mrb[0].mxu0
    %v177 = vpop.f32.mrb[0].mxu0
    %v178 = vpop.f32.mrb[0].mxu0
    %179 = vdwg.mxu0
    %v180 = vmax.f32 %v175, 0.0
    %v181 = vld [vmem:[%s1 + $0x5] sm:$0x1]
    %v182 = vlaneseq
    %v183 = vshrl.u32 %v182, 7
    %v184 = vsub.s32 0, %v183
    %v185 = vrot.slane %v181, %v184
    %v186 = vmul.f32 %v180, %v185
    %187 = vadd.xlane.f32.xlu0 %v186
    %v188 = vpop.xlane.xlu0 %187
    %vm189 = vcmask 7168
    %190 = vst.msk [vmem:[%s3] sm:$0xff] %vm189, %v188
    // Predicated region
    $region18: #{option_pricing_forward.1} parent=1 // pred_check
      _
    $region19: #{option_pricing_forward.1} parent=1 // pred_check_branch
      %192 = sbr.rel (0) target = $region21
    $region20: #{option_pricing_forward.1} parent=1 // pred_region
      _
    $region21: #{option_pricing_forward.1} parent=1 // pred_fallthru
      _
    // Predicated region
    $region22: #{option_pricing_forward.1} parent=1 // pred_check
      _
    $region23: #{option_pricing_forward.1} parent=1 // pred_check_branch
      %194 = sbr.rel (0) target = $region25
    $region24: #{option_pricing_forward.1} parent=1 // pred_region
      _
    $region25: #{option_pricing_forward.1} parent=1 // pred_fallthru
      _
    %195 = vsyncpa [#allocation3], 1

</llo_original>
